<compile_context>
chip_gen: v5e
topology: v5e:2x2
jax: 0.10.0
libtpu: 0.0.40
codegen_flags: <defaults>
</compile_context>

<pallas_src>
import functools

import jax
import jax.numpy as jnp
from jax.experimental import pallas as pl
from jax.experimental.pallas import tpu as pltpu


def _maxpool_kernel(x_ref, o_ref, t_ref, *, k):
    """Pool one (TM, k, Wc) tile down to (TM, Wo), Wo = Wc // k.

    x_ref: (TM, k, Wc)  rows = fused (n, c, out_row) indices; middle axis holds
                        the k vertical taps; lane axis is the input width Wc.
    o_ref: (TM, Wo)     pooled output rows.
    t_ref: (Wc, TM)     VMEM scratch: row-pooled tile transposed so the
                        horizontal taps live on the sublane axis.
    """
    # ---- vertical pooling: static slices over the tap axis, pure VPU max ----
    mh = x_ref[:, 0, :]
    for s in range(1, k):
        mh = jnp.maximum(mh, x_ref[:, s, :])            # (TM, Wc)

    # ---- horizontal pooling, lane-dense ----
    # Transpose (XLU) so width sits on the sublane axis and the large row tile
    # TM becomes the lane axis; each horizontal tap is then a hardware
    # sublane-strided load, reduced with an elementwise max.
    t_ref[...] = mh.T                                   # (Wc, TM)
    wo = o_ref.shape[1]
    mw = t_ref[pl.ds(0, wo, stride=k), :]               # taps 0, k, 2k, ...
    for j in range(1, k):
        mw = jnp.maximum(mw, t_ref[pl.ds(j, wo, stride=k), :])

    # Back to row-major (TM, Wo) and store.
    o_ref[...] = mw.T


def _row_tile(m, target=512, min_steps=4):
    """Rows per grid step: ~`target`, multiple of 8, and enough grid steps for
    the DMA pipeline to overlap (and for both TensorCores on v7x)."""
    if m <= 8:
        return m
    tm = min(target, m)
    if pl.cdiv(m, tm) < min_steps:
        tm = pl.cdiv(m, min_steps)
    tm = max(8, (tm // 8) * 8)
    return min(tm, m)


def max_pool2d(x, k=2):
    """nn.MaxPool2d(kernel_size=k, stride=k) on an NCHW tensor."""
    n, c, h, w = x.shape
    ho, wo = h // k, w // k
    hc, wc = ho * k, wo * k
    if (hc, wc) != (h, w):
        # PyTorch (ceil_mode=False) drops the ragged border.
        x = x[:, :, :hc, :wc]

    m = n * c * ho
    xr = x.reshape(m, k, wc)          # contiguous view: free, no extra HBM pass
    tm = _row_tile(m)

    out = pl.pallas_call(
        functools.partial(_maxpool_kernel, k=k),
        out_shape=jax.ShapeDtypeStruct((m, wo), x.dtype),
        grid=(pl.cdiv(m, tm),),
        in_specs=[pl.BlockSpec((tm, k, wc), lambda i: (i, 0, 0))],
        out_specs=pl.BlockSpec((tm, wo), lambda i: (i, 0)),
        scratch_shapes=[pltpu.VMEM((wc, tm), x.dtype)],
        compiler_params=pltpu.CompilerParams(
            dimension_semantics=("parallel",),
            # double-buffered in/out blocks + scratch stay well below this on
            # v5e / v6e / v7x at TM <= 512.
            vmem_limit_bytes=32 * 1024 * 1024,
        ),
    )(xr)
    return out.reshape(n, c, ho, wo)


def mp_forward(x, k=2):
    """Forward pass of the PyTorch `MP` module (MaxPool2d(k, k))."""
    return max_pool2d(x, k=k)


if __name__ == "__main__":
    N, C, H, W = 2, 4, 16, 16
    key = jax.random.PRNGKey(0)
    x = jax.random.normal(key, (N, C, H, W), jnp.float32)

    fwd = jax.jit(functools.partial(mp_forward, k=2))
    out = jax.block_until_ready(fwd(x))

    assert out.shape == (N, C, H // 2, W // 2), out.shape
    assert bool(jnp.all(jnp.isfinite(out)))
    # Reference with identical semantics to nn.MaxPool2d(2, 2) (exact, max-only).
    ref = jax.lax.reduce_window(x, -jnp.inf, jax.lax.max,
                                (1, 1, 2, 2), (1, 1, 2, 2), "VALID")
    assert bool(jnp.array_equal(out, ref)), "mismatch vs reduce_window reference"
    print("KERNEL_OK")
</pallas_src>

<mosaic_0001>
module attributes {stable_mosaic.version = 11 : i64} {
  func.func @_maxpool_kernel(%arg0: i32, %arg1: memref<16x2x16xf32, #tpu.memory_space<vmem>>, %arg2: memref<16x8xf32, #tpu.memory_space<vmem>>, %arg3: memref<16x16xf32, #tpu.memory_space<vmem>>) attributes {dimension_semantics = [#tpu.dimension_semantics<parallel>], iteration_bounds = array<i64: 4>, scalar_prefetch = 0 : i64, scratch_operands = 1 : i64, tpu.core_type = #tpu.core_type<tc>, window_params = [{transform_indices = @transform_0, window_bounds = array<i64: 16, 2, 16>}, {transform_indices = @transform_1, window_bounds = array<i64: 16, 8>}]} {
    %c0 = arith.constant 0 : index
    %c0_0 = arith.constant 0 : index
    %c0_1 = arith.constant 0 : index
    %0 = vector.load %arg1[%c0, %c0_0, %c0_1] : memref<16x2x16xf32, #tpu.memory_space<vmem>>, vector<16x1x16xf32>
    %1 = vector.shape_cast %0 : vector<16x1x16xf32> to vector<16x16xf32>
    %c0_2 = arith.constant 0 : index
    %c1 = arith.constant 1 : index
    %c0_3 = arith.constant 0 : index
    %2 = vector.load %arg1[%c0_2, %c1, %c0_3] : memref<16x2x16xf32, #tpu.memory_space<vmem>>, vector<16x1x16xf32>
    %3 = vector.shape_cast %2 : vector<16x1x16xf32> to vector<16x16xf32>
    %4 = arith.maximumf %1, %3 : vector<16x16xf32>
    %5 = tpu.transpose %4, [1, 0] : vector<16x16xf32> -> vector<16x16xf32>
    %c0_4 = arith.constant 0 : index
    %c0_5 = arith.constant 0 : index
    %6 = vector.load %arg3[%c0_4, %c0_5] : memref<16x16xf32, #tpu.memory_space<vmem>>, vector<16x16xf32>
    tpu.vector_store %arg3[%c0_4, %c0_5], %5 {strides = array<i32>} : memref<16x16xf32, #tpu.memory_space<vmem>>, vector<16x16xf32>,
    %c0_6 = arith.constant 0 : index
    %c0_7 = arith.constant 0 : index
    %7 = tpu.strided_load %arg3[%c0_6, %c0_7] {strides = array<i32: 2, 1>} : memref<16x16xf32, #tpu.memory_space<vmem>>, vector<8x16xf32>
    %c1_8 = arith.constant 1 : index
    %c0_9 = arith.constant 0 : index
    %8 = tpu.strided_load %arg3[%c1_8, %c0_9] {strides = array<i32: 2, 1>} : memref<16x16xf32, #tpu.memory_space<vmem>>, vector<8x16xf32>
    %9 = arith.maximumf %7, %8 : vector<8x16xf32>
    %10 = tpu.transpose %9, [1, 0] : vector<8x16xf32> -> vector<16x8xf32>
    %c0_10 = arith.constant 0 : index
    %c0_11 = arith.constant 0 : index
    %11 = vector.load %arg2[%c0_10, %c0_11] : memref<16x8xf32, #tpu.memory_space<vmem>>, vector<16x8xf32>
    tpu.vector_store %arg2[%c0_10, %c0_11], %10 {strides = array<i32>} : memref<16x8xf32, #tpu.memory_space<vmem>>, vector<16x8xf32>,
    return
  }
  func.func @transform_0(%arg0: i32) -> (i32, i32, i32) {
    %c0_i32 = arith.constant 0 : i32
    %c0_i32_0 = arith.constant 0 : i32
    %c0_i32_1 = arith.constant 0 : i32
    return %arg0, %c0_i32, %c0_i32_0 : i32, i32, i32
  }
  func.func @transform_1(%arg0: i32) -> (i32, i32) {
    %c0_i32 = arith.constant 0 : i32
    %c0_i32_0 = arith.constant 0 : i32
    return %arg0, %c0_i32 : i32, i32
  }
}

</mosaic_0001>

<llo_original>
// kernel: mp_forward.1
$region0: #{mp_forward.1}
  #allocation0 [shape = 'u32[]', space=smem, size = 0x4, offset = 0x4, fixed_abs, tag = 'smem constant byte address 0x4 - core index']
  #allocation1 [shape = 'u32[72,128]{1,0:T(1,128)}', space=vmem, size = 0x9000, scoped, tag = 'internal scratch']
  #allocation2 [shape = 'f32[16,16]{1,0:T(8,128)}', space=vmem, size = 0x2000, scoped, tag = 'scratch operand']
  %s0 = inlined_call_operand.hbm [shape: f32[64,2,16], index: 0, kind: input, shape index: {}]
  %s1 = inlined_call_operand.hbm [shape: f32[64,8], index: 1, kind: output, shape index: {}]
  %s2 = sld [smem:[#allocation0]]
  $region41: #{mp_forward.1} parent=0
    _
  %s4 = ssub.s32 1, %s2
  %s5 = scalar_select 0, %s4, %s2
  $region1: #{mp_forward.1} parent=0
    #allocation3 [shape = 'u8[32768]{0}', space=vmem, size = 0x8000, scoped, tag = 'input window, operand 0']
    #allocation4 [shape = 's32[2]{0}', space=sflag, size = 0x8, scoped, tag = 'scoped memory for mp_forward.1']
    #allocation5 [shape = 's32[2]{0}', space=sflag, size = 0x8, scoped, tag = 'scoped memory for mp_forward.1']
    #allocation6 [shape = 'u8[16384]{0}', space=vmem, size = 0x4000, scoped, tag = 'output window, operand 0']
    %6 = vsyncpa [#allocation4], 0
    %s7 = scalar_lea.sflag [#allocation4], 1
    %8 = vsyncpa %s7, 0
    %9 = vsyncpa [#allocation5], 0
    %s10 = scalar_lea.sflag [#allocation5], 1
    %11 = vsyncpa %s10, 0
    loop: start=0, step=1, limit=6
    $region2: #{mp_forward.1} parent=1 // loop_pre_header
      _
    $region3: #{mp_forward.1} parent=1 // loop_header
      %s13 = sphi 0, %s17
      %p14 = scmp.ge.s32.totalorder %s13, 6
      %s23 = sphi 0, %s25
      %s26 = sphi 0, %s23
      %s27 = sphi 0, %s26
      %s43 = sphi 0, %s27
      %s49 = sphi 0, %s51
      %s52 = sphi 0, %s49
      %s53 = sphi 0, %s52
      %s69 = sphi 0, %s53
    $region4: #{mp_forward.1} parent=1 // loop_header_branch
      %16 = sbr.rel (%p14) target = $region8
    $region5: #{mp_forward.1} parent=1 // loop_body
      %s18 = ssub.s32 %s13, 1
      %s19 = ssub.s32 %s13, 2
      %s20 = sadd.s32 %s13, 1
      %s21 = ssub.s32 %s13, %s20
      %p22 = scmp.eq.s32.totalorder %s21, 0
      %s24 = sadd.s32 %s23, 1
      %s25 = scalar_select %p22, %s23, %s24
      %p28 = pneg %p22
      %p29 = scmp.eq.s32.totalorder %s13, 3
      %p30 = por %p28, %p29
      %p31 = scmp.ne.s32.totalorder %s23, %s26
      %p32 = scmp.eq.s32.totalorder %s13, 0
      %p33 = por %p31, %p32
      %p34 = scmp.ne.s32.totalorder %s23, %s26
      %p35 = scmp.eq.s32.totalorder %s18, 3
      %p36 = por %p34, %p35
      %p37 = scmp.ne.s32.totalorder %s26, %s27
      %p38 = scmp.eq.s32.totalorder %s18, 0
      %p39 = por %p37, %p38
      %p40 = scmp.ne.s32.totalorder %s26, %s27
      %p41 = scmp.eq.s32.totalorder %s19, 3
      %p42 = por %p40, %p41
      %p44 = scmp.ne.s32.totalorder %s27, %s43
      %p45 = scmp.eq.s32.totalorder %s19, 0
      %p46 = por %p44, %p45
      %s47 = ssub.s32 %s13, %s20
      %p48 = scmp.eq.s32.totalorder %s47, 0
      %s50 = sadd.s32 %s49, 1
      %s51 = scalar_select %p48, %s49, %s50
      %p54 = pneg %p48
      %p55 = scmp.eq.s32.totalorder %s13, 3
      %p56 = por %p54, %p55
      %p57 = scmp.ne.s32.totalorder %s49, %s52
      %p58 = scmp.eq.s32.totalorder %s13, 0
      %p59 = por %p57, %p58
      %p60 = scmp.ne.s32.totalorder %s49, %s52
      %p61 = scmp.eq.s32.totalorder %s18, 3
      %p62 = por %p60, %p61
      %p63 = scmp.ne.s32.totalorder %s52, %s53
      %p64 = scmp.eq.s32.totalorder %s18, 0
      %p65 = por %p63, %p64
      %p66 = scmp.ne.s32.totalorder %s52, %s53
      %p67 = scmp.eq.s32.totalorder %s19, 3
      %p68 = por %p66, %p67
      %p70 = scmp.ne.s32.totalorder %s53, %s69
      %p71 = scmp.eq.s32.totalorder %s19, 0
      %p72 = por %p70, %p71
      %p73 = scmp.le.s32.totalorder 1, %s13
      %p74 = scmp.lt.s32.totalorder %s13, 5
      %p75 = pnand %p73, %p74
      %p76 = pneg %p75
      // Predicated region
      $region9: #{mp_forward.1} parent=5 // pred_check
        _
      $region10: #{mp_forward.1} parent=5 // pred_check_branch
        %78 = sbr.rel (%p75) target = $region12
      $region11: #{mp_forward.1} parent=5 // pred_region
        %s79 = ssub.s32 %s13, 1
      $region12: #{mp_forward.1} parent=5 // pred_fallthru
        _
      %p80 = scmp.lt.s32.totalorder %s13, 4
      // Predicated region
      $region13: #{mp_forward.1} parent=5 // pred_check
        %p81 = pneg %p80
      $region14: #{mp_forward.1} parent=5 // pred_check_branch
        %83 = sbr.rel (%p81) target = $region16
      $region15: #{mp_forward.1} parent=5 // pred_region
        // Predicated region
        $region17: #{mp_forward.1} parent=15 // pred_check
          %p84 = pneg %p33
        $region18: #{mp_forward.1} parent=15 // pred_check_branch
          %86 = sbr.rel (%p84) target = $region20
        $region19: #{mp_forward.1} parent=15 // pred_region
          %s87 = sand.u32 %s23, 1
          %s88 = scalar_lea.sflag [#allocation4], %s87
          %s89 = sand.u32 %s23, 1
          %s90 = smul.addr %s89, 32
          %s91 = scalar_lea.vmem [#allocation3], %s90
          %s92 = smul.u32 16, %s13
          %94 = vsyncadd %s88, 0
          %s95 = smul.addr %s92, 2
          %s96 = scalar_lea.hbm %s0, %s95
          %s97 = sshll.u32 %s96, 4
          %s98 = int_to_ptr.hbm [resolvable:$true] %s97
          %s99 = sshll.u32 %s91, 4
          %s100 = int_to_ptr.vmem [resolvable:$true] %s99
          %105 = dma.hbm_to_vmem [thread:$0]  %s98, 512, %s100, %s88, 32, 32, 2
        $region20: #{mp_forward.1} parent=15 // pred_fallthru
          _
      $region16: #{mp_forward.1} parent=5 // pred_fallthru
        _
      %p106 = scmp.le.s32.totalorder 1, %s13
      %p107 = scmp.lt.s32.totalorder %s13, 5
      %p108 = pnand %p106, %p107
      %p109 = pneg %p108
      // Predicated region
      $region21: #{mp_forward.1} parent=5 // pred_check
        _
      $region22: #{mp_forward.1} parent=5 // pred_check_branch
        %111 = sbr.rel (%p108) target = $region24
      $region23: #{mp_forward.1} parent=5 // pred_region
        %s112 = ssub.s32 %s13, 1
        %s113 = sand.u32 %s26, 1
        %s114 = scalar_lea.sflag [#allocation4], %s113
        %s115 = sand.u32 %s26, 1
        %s116 = smul.addr %s115, 32
        %s117 = scalar_lea.vmem [#allocation3], %s116
        // Predicated region
        $region25: #{mp_forward.1} parent=23 // pred_check
          %p118 = pneg %p39
        $region26: #{mp_forward.1} parent=23 // pred_check_branch
          %120 = sbr.rel (%p118) target = $region28
        $region27: #{mp_forward.1} parent=23 // pred_region
          %122 = dma.done %s114, 512
        $region28: #{mp_forward.1} parent=23 // pred_fallthru
          _
        %s123 = sand.u32 %s26, 1
        %s124 = scalar_lea.sflag [#allocation4], %s123
        %s125 = sand.u32 %s26, 1
        %s126 = smul.addr %s125, 32
        %s127 = scalar_lea.vmem [#allocation3], %s126
        %p128 = pneg %p39
        %p129 = pneg %p36
        %p130 = pneg %p65
        %p131 = pneg %p62
        %s132 = sand.u32 %s52, 1
        %s133 = scalar_lea.sflag [#allocation5], %s132
        %s134 = sand.u32 %s52, 1
        %s135 = smul.addr %s134, 16
        %s136 = scalar_lea.vmem [#allocation6], %s135
        %s137 = smul.u32 16, %s18
        %s138 = smul.u32 2, %s18
        %v139 = vld [vmem:[%s117] sm:$0x1]
        %v140 = vld [vmem:[%s117 + $0x2] sm:$0x1]
        %v141 = vld [vmem:[%s117 + $0x4] sm:$0x1]
        %v142 = vld [vmem:[%s117 + $0x6] sm:$0x1]
        %v143 = vld [vmem:[%s117 + $0x8] sm:$0x1]
        %v144 = vld [vmem:[%s117 + $0xa] sm:$0x1]
        %v145 = vld [vmem:[%s117 + $0xc] sm:$0x1]
        %v146 = vld [vmem:[%s117 + $0xe] sm:$0x1]
        %v147 = vld [vmem:[%s117 + $0x10] sm:$0x1]
        %v148 = vld [vmem:[%s117 + $0x12] sm:$0x1]
        %v149 = vld [vmem:[%s117 + $0x14] sm:$0x1]
        %v150 = vld [vmem:[%s117 + $0x16] sm:$0x1]
        %v151 = vld [vmem:[%s117 + $0x18] sm:$0x1]
        %v152 = vld [vmem:[%s117 + $0x1a] sm:$0x1]
        %v153 = vld [vmem:[%s117 + $0x1c] sm:$0x1]
        %v154 = vld [vmem:[%s117 + $0x1e] sm:$0x1]
        %v155 = vld [vmem:[%s117 + $0x1] sm:$0x1]
        %v156 = vld [vmem:[%s117 + $0x3] sm:$0x1]
        %v157 = vld [vmem:[%s117 + $0x5] sm:$0x1]
        %v158 = vld [vmem:[%s117 + $0x7] sm:$0x1]
        %v159 = vld [vmem:[%s117 + $0x9] sm:$0x1]
        %v160 = vld [vmem:[%s117 + $0xb] sm:$0x1]
        %v161 = vld [vmem:[%s117 + $0xd] sm:$0x1]
        %v162 = vld [vmem:[%s117 + $0xf] sm:$0x1]
        %v163 = vld [vmem:[%s117 + $0x11] sm:$0x1]
        %v164 = vld [vmem:[%s117 + $0x13] sm:$0x1]
        %v165 = vld [vmem:[%s117 + $0x15] sm:$0x1]
        %v166 = vld [vmem:[%s117 + $0x17] sm:$0x1]
        %v167 = vld [vmem:[%s117 + $0x19] sm:$0x1]
        %v168 = vld [vmem:[%s117 + $0x1b] sm:$0x1]
        %v169 = vld [vmem:[%s117 + $0x1d] sm:$0x1]
        %v170 = vld [vmem:[%s117 + $0x1f] sm:$0x1]
        %v171 = vmax.f32 %v139, %v155
        %v172 = vmax.f32 %v140, %v156
        %v173 = vmax.f32 %v141, %v157
        %v174 = vmax.f32 %v142, %v158
        %v175 = vmax.f32 %v143, %v159
        %v176 = vmax.f32 %v144, %v160
        %v177 = vmax.f32 %v145, %v161
        %v178 = vmax.f32 %v146, %v162
        %v179 = vmax.f32 %v147, %v163
        %v180 = vmax.f32 %v148, %v164
        %v181 = vmax.f32 %v149, %v165
        %v182 = vmax.f32 %v150, %v166
        %v183 = vmax.f32 %v151, %v167
        %v184 = vmax.f32 %v152, %v168
        %v185 = vmax.f32 %v153, %v169
        %v186 = vmax.f32 %v154, %v170
        %v203 = vrot.slane %v172, 7
        %vm204 = vcmask 1041409
        %v205 = vsel %vm204, %v203, %v171
        %v206 = vrot.slane %v173, 6
        %vm207 = vcmask 1042434
        %v208 = vsel %vm207, %v206, %v205
        %v209 = vrot.slane %v174, 5
        %vm210 = vcmask 1043459
        %v211 = vsel %vm210, %v209, %v208
        %v212 = vrot.slane %v175, 4
        %vm213 = vcmask 1044484
        %v214 = vsel %vm213, %v212, %v211
        %v215 = vrot.slane %v176, 3
        %vm216 = vcmask 1045509
        %v217 = vsel %vm216, %v215, %v214
        %v218 = vrot.slane %v177, 2
        %vm219 = vcmask 1046534
        %v220 = vsel %vm219, %v218, %v217
        %v221 = vrot.slane %v178, 1
        %vm222 = vcmask 1047559
        %v223 = vsel %vm222, %v221, %v220
        %v224 = vrot.slane %v180, 7
        %v225 = vsel %vm204, %v224, %v179
        %v226 = vrot.slane %v181, 6
        %v227 = vsel %vm207, %v226, %v225
        %v228 = vrot.slane %v182, 5
        %v229 = vsel %vm210, %v228, %v227
        %v230 = vrot.slane %v183, 4
        %v231 = vsel %vm213, %v230, %v229
        %v232 = vrot.slane %v184, 3
        %v233 = vsel %vm216, %v232, %v231
        %v234 = vrot.slane %v185, 2
        %v235 = vsel %vm219, %v234, %v233
        %v236 = vrot.slane %v186, 1
        %v237 = vsel %vm222, %v236, %v235
        %240 = vxpose.xlu0.b32.start [1/16] %v223, 128
        %241 = vxpose.xlu0.b32.cont [2/16] %v237, 128
        %242 = vxpose.xlu0.b32.cont [3/16] 0.0, 128
        %243 = vxpose.xlu0.b32.cont [4/16] 0.0, 128
        %244 = vxpose.xlu0.b32.cont [5/16] 0.0, 128
        %245 = vxpose.xlu0.b32.cont [6/16] 0.0, 128
        %246 = vxpose.xlu0.b32.cont [7/16] 0.0, 128
        %247 = vxpose.xlu0.b32.cont [8/16] 0.0, 128
        %248 = vxpose.xlu0.b32.cont [9/16] 0.0, 128
        %249 = vxpose.xlu0.b32.cont [10/16] 0.0, 128
        %250 = vxpose.xlu0.b32.cont [11/16] 0.0, 128
        %251 = vxpose.xlu0.b32.cont [12/16] 0.0, 128
        %252 = vxpose.xlu0.b32.cont [13/16] 0.0, 128
        %253 = vxpose.xlu0.b32.cont [14/16] 0.0, 128
        %254 = vxpose.xlu0.b32.cont [15/16] 0.0, 128
        %255 = vxpose.xlu0.b32.end [16/16] 0.0, 128
        %v256 = vpop.trf.xlu0
        %v257 = vpop.trf.xlu0
        %v258 = vpop.trf.xlu0
        %v259 = vpop.trf.xlu0
        %v260 = vpop.trf.xlu0
        %v261 = vpop.trf.xlu0
        %v262 = vpop.trf.xlu0
        %v263 = vpop.trf.xlu0
        %v264 = vpop.trf.xlu0
        %v265 = vpop.trf.xlu0
        %v266 = vpop.trf.xlu0
        %v267 = vpop.trf.xlu0
        %v268 = vpop.trf.xlu0
        %v269 = vpop.trf.xlu0
        %v270 = vpop.trf.xlu0
        %v271 = vpop.trf.xlu0
        %vm272 = vcmask 130048
        %273 = vst.msk [vmem:[#allocation2] sm:$0xff] %vm272, %v256
        %274 = vst.msk [vmem:[#allocation2 + $0x8] sm:$0xff] %vm272, %v257
        %v275 = vld [vmem:[#allocation2] ss:$2 sm:$0xff]
        %s276 = scalar_lea.vmem [#allocation2], 1
        %v277 = vld [vmem:[%s276] ss:$2 sm:$0xff]
        %v278 = vmax.f32 %v275, %v277
        %279 = vxpose.xlu0.b32.start [1/16] %v278, 128
        %280 = vxpose.xlu0.b32.cont [2/16] 0.0, 128
        %281 = vxpose.xlu0.b32.cont [3/16] 0.0, 128
        %282 = vxpose.xlu0.b32.cont [4/16] 0.0, 128
        %283 = vxpose.xlu0.b32.cont [5/16] 0.0, 128
        %284 = vxpose.xlu0.b32.cont [6/16] 0.0, 128
        %285 = vxpose.xlu0.b32.cont [7/16] 0.0, 128
        %286 = vxpose.xlu0.b32.cont [8/16] 0.0, 128
        %287 = vxpose.xlu0.b32.cont [9/16] 0.0, 128
        %288 = vxpose.xlu0.b32.cont [10/16] 0.0, 128
        %289 = vxpose.xlu0.b32.cont [11/16] 0.0, 128
        %290 = vxpose.xlu0.b32.cont [12/16] 0.0, 128
        %291 = vxpose.xlu0.b32.cont [13/16] 0.0, 128
        %292 = vxpose.xlu0.b32.cont [14/16] 0.0, 128
        %293 = vxpose.xlu0.b32.cont [15/16] 0.0, 128
        %294 = vxpose.xlu0.b32.end [16/16] 0.0, 128
        %v295 = vpop.trf.xlu0
        %v296 = vpop.trf.xlu0
        %v297 = vpop.trf.xlu0
        %v298 = vpop.trf.xlu0
        %v299 = vpop.trf.xlu0
        %v300 = vpop.trf.xlu0
        %v301 = vpop.trf.xlu0
        %v302 = vpop.trf.xlu0
        %v303 = vpop.trf.xlu0
        %v304 = vpop.trf.xlu0
        %v305 = vpop.trf.xlu0
        %v306 = vpop.trf.xlu0
        %v307 = vpop.trf.xlu0
        %v308 = vpop.trf.xlu0
        %v309 = vpop.trf.xlu0
        %v310 = vpop.trf.xlu0
        %vm311 = vcmask 64512
        %312 = vst.msk [vmem:[%s136] sm:$0xff] %vm311, %v295
        %313 = vst.msk [vmem:[%s136 + $0x8] sm:$0xff] %vm311, %v296
        %s314 = sand.u32 %s52, 1
        %s315 = scalar_lea.sflag [#allocation5], %s314
        %s316 = sand.u32 %s52, 1
        %s317 = smul.addr %s316, 16
        %s318 = scalar_lea.vmem [#allocation6], %s317
        // Predicated region
        $region29: #{mp_forward.1} parent=23 // pred_check
          %p319 = pneg %p62
        $region30: #{mp_forward.1} parent=23 // pred_check_branch
          %321 = sbr.rel (%p319) target = $region32
        $region31: #{mp_forward.1} parent=23 // pred_region
          %s322 = smul.u32 2, %s18
          %324 = vsyncadd %s315, 0
          %s325 = smul.addr %s322, 8
          %s326 = scalar_lea.hbm %s1, %s325
          %s327 = sshll.u32 %s318, 4
          %s328 = int_to_ptr.vmem [resolvable:$true] %s327
          %s329 = sshll.u32 %s326, 4
          %s330 = int_to_ptr.hbm [resolvable:$true] %s329
          %335 = dma.vmem_to_hbm [thread:$0]  %s328, 256, %s330, %s315, 128, 128, 8
        $region32: #{mp_forward.1} parent=23 // pred_fallthru
          _
      $region24: #{mp_forward.1} parent=5 // pred_fallthru
        _
      %p336 = scmp.le.s32.totalorder 2, %s13
      // Predicated region
      $region33: #{mp_forward.1} parent=5 // pred_check
        %p337 = pneg %p336
      $region34: #{mp_forward.1} parent=5 // pred_check_branch
        %339 = sbr.rel (%p337) target = $region36
      $region35: #{mp_forward.1} parent=5 // pred_region
        %s340 = ssub.s32 %s13, 2
        // Predicated region
        $region37: #{mp_forward.1} parent=35 // pred_check
          %p341 = pneg %p68
        $region38: #{mp_forward.1} parent=35 // pred_check_branch
          %343 = sbr.rel (%p341) target = $region40
        $region39: #{mp_forward.1} parent=35 // pred_region
          %s344 = sand.u32 %s53, 1
          %s345 = scalar_lea.sflag [#allocation5], %s344
          %s346 = sand.u32 %s53, 1
          %s347 = smul.addr %s346, 16
          %s348 = scalar_lea.vmem [#allocation6], %s347
          %350 = dma.done %s345, 256
        $region40: #{mp_forward.1} parent=35 // pred_fallthru
          _
      $region36: #{mp_forward.1} parent=5 // pred_fallthru
        _
    $region6: #{mp_forward.1} parent=1 // loop_footer
      %s17 = sadd.s32 1, %s13
    $region7: #{mp_forward.1} parent=1 // loop_footer_branch
      %12 = sbr.rel target = $region3
    $region8: #{mp_forward.1} parent=1 // loop_exit
      _
    %351 = vsyncpa [#allocation4], 1
    %s352 = scalar_lea.sflag [#allocation4], 1
    %353 = vsyncpa %s352, 1
    %354 = vsyncpa [#allocation5], 1
    %s355 = scalar_lea.sflag [#allocation5], 1
    %356 = vsyncpa %s355, 1

</llo_original>
